<compile_context>
chip_gen: v5e
topology: v5e:2x2
jax: 0.10.0
libtpu: 0.0.40
codegen_flags: <defaults>
</compile_context>

<pallas_src>
import functools

import jax
import jax.numpy as jnp
from jax import lax
from jax.experimental import pallas as pl
from jax.experimental.pallas import tpu as pltpu


def _round_up(a, m):
    return (a + m - 1) // m * m


def _ratio_mlp_kernel(n_layers, n_parameters, out_cols, theta_ref, x_ref, *refs):
    """refs = (w0_theta, w0_x, b0, w1, b1, ..., w_{L-1}, b_{L-1}, out_ref)."""
    param_refs = refs[:-1]
    out_ref = refs[-1]

    tile_b = theta_ref.shape[0]

    w0t = param_refs[0][...]   # (P, h0)
    w0x = param_refs[1][...]   # (O, h0)
    b0 = param_refs[2][...]    # (1, h0)

    # ---- forward pass (split first layer: no in-kernel concat) ---------------
    h = (jnp.dot(theta_ref[...], w0t, preferred_element_type=jnp.float32)
         + jnp.dot(x_ref[...], w0x, preferred_element_type=jnp.float32)
         + b0)

    acts = []  # post-tanh activations, needed for the backward pass
    for li in range(1, n_layers):
        w = param_refs[1 + 2 * li][...]       # (in, out)
        b = param_refs[2 + 2 * li][...]       # (1, out)
        a = jnp.tanh(h)
        acts.append(a)
        h = jnp.dot(a, w, preferred_element_type=jnp.float32) + b

    log_r = h                                  # (tile_b, 1)

    # Stable s_hat = sigmoid(-log_r) = 1 / (1 + exp(log_r)) without inf intermediates.
    e = jnp.exp(-jnp.abs(log_r))
    s_pos = e / (1.0 + e)                      # sigmoid(-|log_r|)
    s_hat = jnp.where(log_r >= 0.0, s_pos, 1.0 - s_pos)

    # ---- backward pass: d log_r / d theta ------------------------------------
    # grad_outputs = ones_like(log_r); last-layer "matmul" is a pure broadcast.
    if n_layers == 1:
        # single linear layer acting directly on concat(theta, x)
        g_theta = jnp.broadcast_to(jnp.transpose(w0t), (tile_b, n_parameters))
    else:
        w_last = param_refs[1 + 2 * (n_layers - 1)][...]       # (h_{L-2}, 1)
        g = jnp.broadcast_to(jnp.transpose(w_last), (tile_b, w_last.shape[0]))
        a = acts[n_layers - 2]
        g = g * (1.0 - a * a)                                  # tanh'
        for li in range(n_layers - 2, 0, -1):
            w = param_refs[1 + 2 * li][...]                    # (in, out)
            g = lax.dot_general(
                g, w, (((1,), (1,)), ((), ())), preferred_element_type=jnp.float32
            )
            a = acts[li - 1]
            g = g * (1.0 - a * a)
        g_theta = lax.dot_general(
            g, w0t, (((1,), (1,)), ((), ())), preferred_element_type=jnp.float32
        )                                                      # (tile_b, P)

    # ---- pack everything into one lane-dense output slab ---------------------
    pieces = [log_r, s_hat, g_theta]
    pad_w = out_cols - 2 - n_parameters
    if pad_w > 0:
        pieces.append(jnp.zeros((tile_b, pad_w), jnp.float32))
    out_ref[...] = jnp.concatenate(pieces, axis=1)


def ratio_model_forward(theta, x, weights, biases, tile_b=1024):
    """Pallas equivalent of DenseSingleParameterizedRatioModel.forward(theta, x).

    weights[i]: (in_i, out_i) f32 ; biases[i]: (1, out_i) f32.
    Returns (s_hat, log_r_hat, t_hat).
    """
    theta = theta.astype(jnp.float32)
    x = x.astype(jnp.float32)
    B, P = theta.shape
    _, O = x.shape
    n_layers = len(weights)

    # ---- batch tiling (pad B to a multiple of the tile) -----------------------
    tile_b = _round_up(max(int(tile_b), 8), 8)
    tb = min(tile_b, _round_up(B, 8))
    B_pad = _round_up(B, tb)
    if B_pad != B:
        theta_p = jnp.pad(theta, ((0, B_pad - B), (0, 0)))
        x_p = jnp.pad(x, ((0, B_pad - B), (0, 0)))
    else:
        theta_p, x_p = theta, x

    # lane-dense packed output: col 0 = log_r, col 1 = s_hat, cols 2:2+P = t_hat
    out_cols = max(128, _round_up(P + 2, 128))

    # split the first weight so the kernel never concatenates theta/x on lanes
    w0 = weights[0].astype(jnp.float32)
    flat_params = [w0[:P, :], w0[P:, :], biases[0].astype(jnp.float32)]
    for w, b in zip(weights[1:], biases[1:]):
        flat_params += [w.astype(jnp.float32), b.astype(jnp.float32)]

    grid = (B_pad // tb,)

    in_specs = [
        pl.BlockSpec((tb, P), lambda i: (i, 0)),     # theta tile
        pl.BlockSpec((tb, O), lambda i: (i, 0)),     # x tile
    ]
    # parameters: full arrays, constant index_map -> resident in VMEM across steps
    in_specs += [pl.BlockSpec(p.shape, lambda i: (0, 0)) for p in flat_params]

    out_shape = jax.ShapeDtypeStruct((B_pad, out_cols), jnp.float32)
    out_specs = pl.BlockSpec((tb, out_cols), lambda i: (i, 0))

    # VMEM budget: double-buffered input/output tiles + resident params + headroom.
    params_bytes = sum(int(p.size) * 4 for p in flat_params)
    tile_bytes = 4 * (2 * tb * (P + O) + 2 * tb * out_cols) + params_bytes
    vmem_limit = int(min(max(2 * tile_bytes, 8 << 20), 32 << 20))

    matmul_flops = 2 * B_pad * sum(int(w.shape[0]) * int(w.shape[1]) for w in weights)
    hidden_sum = sum(int(w.shape[1]) for w in weights[:-1])
    cost = pl.CostEstimate(
        flops=int(2 * matmul_flops),                       # forward + backward
        transcendentals=int(B_pad * (hidden_sum + 1)),     # tanh + exp
        bytes_accessed=int(4 * (B_pad * (P + O) + B_pad * out_cols
                                + sum(int(p.size) for p in flat_params))),
    )

    kernel = functools.partial(_ratio_mlp_kernel, n_layers, P, out_cols)

    packed = pl.pallas_call(
        kernel,
        grid=grid,
        in_specs=in_specs,
        out_specs=out_specs,
        out_shape=out_shape,
        compiler_params=pltpu.CompilerParams(
            dimension_semantics=("parallel",),
            vmem_limit_bytes=vmem_limit,
        ),
        cost_estimate=cost,
    )(theta_p, x_p, *flat_params)

    packed = packed[:B]
    log_r_hat = packed[:, 0:1]
    s_hat = packed[:, 1:2]
    t_hat = packed[:, 2:2 + P]
    return s_hat, log_r_hat, t_hat


# ------------------------- pure-JAX reference (for checking) ------------------
def _ref_log_r(theta, x, weights, biases):
    h = jnp.concatenate([theta, x], axis=1)
    for li, (w, b) in enumerate(zip(weights, biases)):
        if li > 0:
            h = jnp.tanh(h)
        h = h @ w + b
    return h


if __name__ == "__main__":
    # Small shapes consistent with the module: dense MLP on (theta, x) row vectors.
    # B=40 with tile_b=16 exercises batch tiling (grid=3) and batch padding (40->48).
    B = 40
    n_observables = 10
    n_parameters = 2
    n_hidden = (32, 32)

    key = jax.random.PRNGKey(0)
    k_theta, k_x, *k_params = jax.random.split(key, 2 + 2 * (len(n_hidden) + 1))

    theta = jax.random.normal(k_theta, (B, n_parameters), dtype=jnp.float32)
    x = jax.random.normal(k_x, (B, n_observables), dtype=jnp.float32)

    # Deterministic PyTorch-Linear-like uniform(-1/sqrt(fan_in), +) init.
    layer_dims = [n_observables + n_parameters] + list(n_hidden) + [1]
    weights, biases = [], []
    for li in range(len(layer_dims) - 1):
        fan_in, fan_out = layer_dims[li], layer_dims[li + 1]
        bound = 1.0 / (fan_in ** 0.5)
        kw, kb = jax.random.split(k_params[li])
        w = jax.random.uniform(kw, (fan_in, fan_out), jnp.float32, -bound, bound)
        b = jax.random.uniform(kb, (1, fan_out), jnp.float32, -bound, bound)
        weights.append(w)
        biases.append(b)

    s_hat, log_r_hat, t_hat = ratio_model_forward(theta, x, weights, biases, tile_b=16)
    jax.block_until_ready((s_hat, log_r_hat, t_hat))

    # Sanity-check against a pure-JAX reference (forward + autodiff score).
    log_r_ref = _ref_log_r(theta, x, weights, biases)
    s_ref = 1.0 / (1.0 + jnp.exp(log_r_ref))
    t_ref = jax.grad(lambda th: _ref_log_r(th, x, weights, biases).sum())(theta)

    assert s_hat.shape == (B, 1) and log_r_hat.shape == (B, 1) and t_hat.shape == (B, n_parameters)
    assert jnp.allclose(log_r_hat, log_r_ref, atol=1e-5, rtol=1e-5)
    assert jnp.allclose(s_hat, s_ref, atol=1e-5, rtol=1e-5)
    assert jnp.allclose(t_hat, t_ref, atol=1e-5, rtol=1e-5)

    # TODO(synk): dropout_prob > 0 (nn.Dropout) and the return_grad_x path are not
    # implemented (module defaults: dropout off, return_grad_x=False).
    print("KERNEL_OK")
</pallas_src>

<mosaic_0001>
module attributes {stable_mosaic.version = 11 : i64} {
  func.func @_ratio_mlp_kernel(%arg0: i32, %arg1: memref<16x2xf32, #tpu.memory_space<vmem>>, %arg2: memref<16x10xf32, #tpu.memory_space<vmem>>, %arg3: memref<2x32xf32, #tpu.memory_space<vmem>>, %arg4: memref<10x32xf32, #tpu.memory_space<vmem>>, %arg5: memref<1x32xf32, #tpu.memory_space<vmem>>, %arg6: memref<32x32xf32, #tpu.memory_space<vmem>>, %arg7: memref<1x32xf32, #tpu.memory_space<vmem>>, %arg8: memref<32x1xf32, #tpu.memory_space<vmem>>, %arg9: memref<1x1xf32, #tpu.memory_space<vmem>>, %arg10: memref<16x128xf32, #tpu.memory_space<vmem>>) attributes {dimension_semantics = [#tpu.dimension_semantics<parallel>], iteration_bounds = array<i64: 3>, scalar_prefetch = 0 : i64, scratch_operands = 0 : i64, tpu.core_type = #tpu.core_type<tc>, window_params = [{transform_indices = @transform_0, window_bounds = array<i64: 16, 2>}, {transform_indices = @transform_1, window_bounds = array<i64: 16, 10>}, {pipeline_mode = #tpu.pipeline_mode<synchronous>, transform_indices = @transform_2, window_bounds = array<i64: 2, 32>}, {pipeline_mode = #tpu.pipeline_mode<synchronous>, transform_indices = @transform_3, window_bounds = array<i64: 10, 32>}, {pipeline_mode = #tpu.pipeline_mode<synchronous>, transform_indices = @transform_4, window_bounds = array<i64: 1, 32>}, {pipeline_mode = #tpu.pipeline_mode<synchronous>, transform_indices = @transform_5, window_bounds = array<i64: 32, 32>}, {pipeline_mode = #tpu.pipeline_mode<synchronous>, transform_indices = @transform_6, window_bounds = array<i64: 1, 32>}, {pipeline_mode = #tpu.pipeline_mode<synchronous>, transform_indices = @transform_7, window_bounds = array<i64: 32, 1>}, {pipeline_mode = #tpu.pipeline_mode<synchronous>, transform_indices = @transform_8, window_bounds = array<i64: 1, 1>}, {transform_indices = @transform_9, window_bounds = array<i64: 16, 128>}]} {
    %c0 = arith.constant 0 : index
    %c0_0 = arith.constant 0 : index
    %0 = vector.load %arg3[%c0, %c0_0] : memref<2x32xf32, #tpu.memory_space<vmem>>, vector<2x32xf32>
    %c0_1 = arith.constant 0 : index
    %c0_2 = arith.constant 0 : index
    %1 = vector.load %arg4[%c0_1, %c0_2] : memref<10x32xf32, #tpu.memory_space<vmem>>, vector<10x32xf32>
    %c0_3 = arith.constant 0 : index
    %c0_4 = arith.constant 0 : index
    %2 = vector.load %arg5[%c0_3, %c0_4] : memref<1x32xf32, #tpu.memory_space<vmem>>, vector<1x32xf32>
    %c0_5 = arith.constant 0 : index
    %c0_6 = arith.constant 0 : index
    %3 = vector.load %arg1[%c0_5, %c0_6] : memref<16x2xf32, #tpu.memory_space<vmem>>, vector<16x2xf32>
    %cst = arith.constant dense<0.000000e+00> : vector<16x32xf32>
    %4 = tpu.matmul %3, %0, %cst {dimension_numbers = #tpu.dot_dimension_numbers<[1], [0], [0], [1], [0, 0, 1, 1], [], []>} : vector<16x2xf32>, vector<2x32xf32>, vector<16x32xf32> -> vector<16x32xf32>
    %c0_7 = arith.constant 0 : index
    %c0_8 = arith.constant 0 : index
    %5 = vector.load %arg2[%c0_7, %c0_8] : memref<16x10xf32, #tpu.memory_space<vmem>>, vector<16x10xf32>
    %cst_9 = arith.constant dense<0.000000e+00> : vector<16x32xf32>
    %6 = tpu.matmul %5, %1, %cst_9 {dimension_numbers = #tpu.dot_dimension_numbers<[1], [0], [0], [1], [0, 0, 1, 1], [], []>} : vector<16x10xf32>, vector<10x32xf32>, vector<16x32xf32> -> vector<16x32xf32>
    %7 = arith.addf %4, %6 : vector<16x32xf32>
    %8 = vector.broadcast %2 : vector<1x32xf32> to vector<16x32xf32>
    %9 = arith.addf %7, %8 : vector<16x32xf32>
    %c0_10 = arith.constant 0 : index
    %c0_11 = arith.constant 0 : index
    %10 = vector.load %arg6[%c0_10, %c0_11] : memref<32x32xf32, #tpu.memory_space<vmem>>, vector<32x32xf32>
    %c0_12 = arith.constant 0 : index
    %c0_13 = arith.constant 0 : index
    %11 = vector.load %arg7[%c0_12, %c0_13] : memref<1x32xf32, #tpu.memory_space<vmem>>, vector<1x32xf32>
    %12 = math.tanh %9 : vector<16x32xf32>
    %cst_14 = arith.constant dense<0.000000e+00> : vector<16x32xf32>
    %13 = tpu.matmul %12, %10, %cst_14 {dimension_numbers = #tpu.dot_dimension_numbers<[1], [0], [0], [1], [0, 0, 1, 1], [], []>} : vector<16x32xf32>, vector<32x32xf32>, vector<16x32xf32> -> vector<16x32xf32>
    %14 = vector.broadcast %11 : vector<1x32xf32> to vector<16x32xf32>
    %15 = arith.addf %13, %14 : vector<16x32xf32>
    %c0_15 = arith.constant 0 : index
    %c0_16 = arith.constant 0 : index
    %16 = vector.load %arg8[%c0_15, %c0_16] : memref<32x1xf32, #tpu.memory_space<vmem>>, vector<32x1xf32>
    %c0_17 = arith.constant 0 : index
    %c0_18 = arith.constant 0 : index
    %17 = vector.load %arg9[%c0_17, %c0_18] : memref<1x1xf32, #tpu.memory_space<vmem>>, vector<1x1xf32>
    %18 = math.tanh %15 : vector<16x32xf32>
    %cst_19 = arith.constant dense<0.000000e+00> : vector<16x1xf32>
    %19 = tpu.matmul %18, %16, %cst_19 {dimension_numbers = #tpu.dot_dimension_numbers<[1], [0], [0], [1], [0, 0, 1, 1], [], []>} : vector<16x32xf32>, vector<32x1xf32>, vector<16x1xf32> -> vector<16x1xf32>
    %20 = vector.broadcast %17 : vector<1x1xf32> to vector<16x1xf32>
    %21 = arith.addf %19, %20 : vector<16x1xf32>
    %22 = math.absf %21 : vector<16x1xf32>
    %cst_20 = arith.constant 0.000000e+00 : f32
    %23 = vector.broadcast %cst_20 : f32 to vector<16x1xf32>
    %24 = arith.subf %23, %22 : vector<16x1xf32>
    %25 = math.exp %24 : vector<16x1xf32>
    %cst_21 = arith.constant 1.000000e+00 : f32
    %26 = vector.broadcast %cst_21 : f32 to vector<16x1xf32>
    %27 = arith.addf %26, %25 : vector<16x1xf32>
    %28 = arith.divf %25, %27 : vector<16x1xf32>
    %cst_22 = arith.constant 0.000000e+00 : f32
    %29 = vector.broadcast %cst_22 : f32 to vector<16x1xf32>
    %30 = arith.cmpf oge, %21, %29 : vector<16x1xf32>
    %cst_23 = arith.constant 1.000000e+00 : f32
    %31 = vector.broadcast %cst_23 : f32 to vector<16x1xf32>
    %32 = arith.subf %31, %28 : vector<16x1xf32>
    %33 = arith.select %30, %28, %32 : vector<16x1xi1>, vector<16x1xf32>
    %c0_24 = arith.constant 0 : index
    %c0_25 = arith.constant 0 : index
    %34 = vector.load %arg8[%c0_24, %c0_25] : memref<32x1xf32, #tpu.memory_space<vmem>>, vector<32x1xf32>
    %35 = tpu.transpose %34, [1, 0] : vector<32x1xf32> -> vector<1x32xf32>
    %36 = vector.shape_cast %35 : vector<1x32xf32> to vector<1x32xf32>
    %37 = vector.broadcast %36 : vector<1x32xf32> to vector<16x32xf32>
    %38 = arith.mulf %18, %18 : vector<16x32xf32>
    %cst_26 = arith.constant 1.000000e+00 : f32
    %39 = vector.broadcast %cst_26 : f32 to vector<16x32xf32>
    %40 = arith.subf %39, %38 : vector<16x32xf32>
    %41 = arith.mulf %37, %40 : vector<16x32xf32>
    %c0_27 = arith.constant 0 : index
    %c0_28 = arith.constant 0 : index
    %42 = vector.load %arg6[%c0_27, %c0_28] : memref<32x32xf32, #tpu.memory_space<vmem>>, vector<32x32xf32>
    %cst_29 = arith.constant dense<0.000000e+00> : vector<16x32xf32>
    %43 = tpu.matmul %41, %42, %cst_29 {dimension_numbers = #tpu.dot_dimension_numbers<[1], [1], [0], [0], [0, 0, 1, 0], [], []>} : vector<16x32xf32>, vector<32x32xf32>, vector<16x32xf32> -> vector<16x32xf32>
    %44 = arith.mulf %12, %12 : vector<16x32xf32>
    %cst_30 = arith.constant 1.000000e+00 : f32
    %45 = vector.broadcast %cst_30 : f32 to vector<16x32xf32>
    %46 = arith.subf %45, %44 : vector<16x32xf32>
    %47 = arith.mulf %43, %46 : vector<16x32xf32>
    %cst_31 = arith.constant dense<0.000000e+00> : vector<16x2xf32>
    %48 = tpu.matmul %47, %0, %cst_31 {dimension_numbers = #tpu.dot_dimension_numbers<[1], [1], [0], [0], [0, 0, 1, 0], [], []>} : vector<16x32xf32>, vector<2x32xf32>, vector<16x2xf32> -> vector<16x2xf32>
    %cst_32 = arith.constant 0.000000e+00 : f32
    %49 = vector.broadcast %cst_32 : f32 to vector<16x124xf32>
    %50 = tpu.concatenate %21, %33, %48, %49 in 1 : vector<16x1xf32>, vector<16x1xf32>, vector<16x2xf32>, vector<16x124xf32> -> vector<16x128xf32>
    %c0_33 = arith.constant 0 : index
    %c0_34 = arith.constant 0 : index
    %51 = vector.load %arg10[%c0_33, %c0_34] : memref<16x128xf32, #tpu.memory_space<vmem>>, vector<16x128xf32>
    tpu.vector_store %arg10[%c0_33, %c0_34], %50 {strides = array<i32>} : memref<16x128xf32, #tpu.memory_space<vmem>>, vector<16x128xf32>,
    return
  }
  func.func @transform_0(%arg0: i32) -> (i32, i32) {
    %c0_i32 = arith.constant 0 : i32
    %c0_i32_0 = arith.constant 0 : i32
    return %arg0, %c0_i32 : i32, i32
  }
  func.func @transform_1(%arg0: i32) -> (i32, i32) {
    %c0_i32 = arith.constant 0 : i32
    %c0_i32_0 = arith.constant 0 : i32
    return %arg0, %c0_i32 : i32, i32
  }
  func.func @transform_2(%arg0: i32) -> (i32, i32) {
    %c0_i32 = arith.constant 0 : i32
    %c0_i32_0 = arith.constant 0 : i32
    %c0_i32_1 = arith.constant 0 : i32
    return %c0_i32, %c0_i32_0 : i32, i32
  }
  func.func @transform_3(%arg0: i32) -> (i32, i32) {
    %c0_i32 = arith.constant 0 : i32
    %c0_i32_0 = arith.constant 0 : i32
    %c0_i32_1 = arith.constant 0 : i32
    return %c0_i32, %c0_i32_0 : i32, i32
  }
  func.func @transform_4(%arg0: i32) -> (i32, i32) {
    %c0_i32 = arith.constant 0 : i32
    %c0_i32_0 = arith.constant 0 : i32
    %c0_i32_1 = arith.constant 0 : i32
    return %c0_i32, %c0_i32_0 : i32, i32
  }
  func.func @transform_5(%arg0: i32) -> (i32, i32) {
    %c0_i32 = arith.constant 0 : i32
    %c0_i32_0 = arith.constant 0 : i32
    %c0_i32_1 = arith.constant 0 : i32
    return %c0_i32, %c0_i32_0 : i32, i32
  }
  func.func @transform_6(%arg0: i32) -> (i32, i32) {
    %c0_i32 = arith.constant 0 : i32
    %c0_i32_0 = arith.constant 0 : i32
    %c0_i32_1 = arith.constant 0 : i32
    return %c0_i32, %c0_i32_0 : i32, i32
  }
  func.func @transform_7(%arg0: i32) -> (i32, i32) {
    %c0_i32 = arith.constant 0 : i32
    %c0_i32_0 = arith.constant 0 : i32
    %c0_i32_1 = arith.constant 0 : i32
    return %c0_i32, %c0_i32_0 : i32, i32
  }
  func.func @transform_8(%arg0: i32) -> (i32, i32) {
    %c0_i32 = arith.constant 0 : i32
    %c0_i32_0 = arith.constant 0 : i32
    %c0_i32_1 = arith.constant 0 : i32
    return %c0_i32, %c0_i32_0 : i32, i32
  }
  func.func @transform_9(%arg0: i32) -> (i32, i32) {
    %c0_i32 = arith.constant 0 : i32
    %c0_i32_0 = arith.constant 0 : i32
    return %arg0, %c0_i32 : i32, i32
  }
}

</mosaic_0001>

<llo_original>
// kernel: tpu_custom_call.1
$region0: #{tpu_custom_call.1}
  #allocation0 [shape = 'u32[]', space=smem, size = 0x4, offset = 0x4, fixed_abs, tag = 'smem constant byte address 0x4 - core index']
  #allocation1 [shape = 'u32[72,128]{1,0:T(1,128)}', space=vmem, size = 0x9000, scoped, tag = 'internal scratch']
  #allocation2 [shape = 'f32[1,1]{1,0:T(1,128)S(1)}', space=vmem, size = 0x200, scoped, tag = 'scoped memory for tpu_custom_call.1']
  %s0 = inlined_call_operand.vmem [shape: f32[48,2], index: 0, kind: input, shape index: {}]
  %s1 = inlined_call_operand.vmem [shape: f32[48,10], index: 1, kind: input, shape index: {}]
  %s2 = inlined_call_operand.vmem [shape: f32[2,32], index: 2, kind: input, shape index: {}]
  %s3 = inlined_call_operand.vmem [shape: f32[10,32], index: 3, kind: input, shape index: {}]
  %s4 = inlined_call_operand.vmem [shape: f32[1,32], index: 4, kind: input, shape index: {}]
  %s5 = inlined_call_operand.vmem [shape: f32[32,32], index: 5, kind: input, shape index: {}]
  %s6 = inlined_call_operand.vmem [shape: f32[1,32], index: 6, kind: input, shape index: {}]
  %s7 = inlined_call_operand.vmem [shape: f32[32,1], index: 7, kind: input, shape index: {}]
  %s8 = inlined_call_operand.<no memory space> [shape: f32[1,1], index: 8, kind: input, shape index: {}]
  %s9 = inlined_call_operand.hbm [shape: f32[48,128], index: 9, kind: output, shape index: {}]
  %s10 = sld [smem:[#allocation0]]
  $region69: #{tpu_custom_call.1} parent=0
    _
  %s12 = ssub.s32 1, %s10
  %s13 = scalar_select 0, %s12, %s10
  %v14 = vstv %s8
  %15 = vst [vmem:[#allocation2] sm:$0x1] %v14
  $region1: #{tpu_custom_call.1} parent=0
    #allocation3 [shape = 'u8[16384]{0}', space=vmem, size = 0x4000, scoped, tag = 'output window, operand 0']
    #allocation4 [shape = 's32[2]{0}', space=sflag, size = 0x8, scoped, tag = 'scoped memory for tpu_custom_call.1']
    %16 = vsyncpa [#allocation4], 0
    %s17 = scalar_lea.sflag [#allocation4], 1
    %18 = vsyncpa %s17, 0
    loop: start=0, step=1, limit=5
    $region2: #{tpu_custom_call.1} parent=1 // loop_pre_header
      _
    $region3: #{tpu_custom_call.1} parent=1 // loop_header
      %s20 = sphi 0, %s24
      %p21 = scmp.ge.s32.totalorder %s20, 5
      %s30 = sphi 0, %s32
      %s33 = sphi 0, %s30
      %s34 = sphi 0, %s33
      %s50 = sphi 0, %s34
      %s56 = sphi 0, %s58
      %s59 = sphi 0, %s56
      %s60 = sphi 0, %s59
      %s76 = sphi 0, %s60
      %s80 = sphi 0, %s80
      %s82 = sphi 0, %s80
      %s83 = sphi 0, %s82
      %s97 = sphi 0, %s83
      %s101 = sphi 0, %s101
      %s103 = sphi 0, %s101
      %s104 = sphi 0, %s103
      %s118 = sphi 0, %s104
      %s122 = sphi 0, %s122
      %s124 = sphi 0, %s122
      %s125 = sphi 0, %s124
      %s139 = sphi 0, %s125
      %s143 = sphi 0, %s143
      %s145 = sphi 0, %s143
      %s146 = sphi 0, %s145
      %s160 = sphi 0, %s146
      %s164 = sphi 0, %s164
      %s166 = sphi 0, %s164
      %s167 = sphi 0, %s166
      %s181 = sphi 0, %s167
      %s185 = sphi 0, %s185
      %s187 = sphi 0, %s185
      %s188 = sphi 0, %s187
      %s202 = sphi 0, %s188
      %s206 = sphi 0, %s206
      %s208 = sphi 0, %s206
      %s209 = sphi 0, %s208
      %s223 = sphi 0, %s209
      %s229 = sphi 0, %s231
      %s232 = sphi 0, %s229
      %s233 = sphi 0, %s232
      %s249 = sphi 0, %s233
    $region4: #{tpu_custom_call.1} parent=1 // loop_header_branch
      %23 = sbr.rel (%p21) target = $region8
    $region5: #{tpu_custom_call.1} parent=1 // loop_body
      %s25 = ssub.s32 %s20, 1
      %s26 = ssub.s32 %s20, 2
      %s27 = sadd.s32 %s20, 1
      %s28 = ssub.s32 %s20, %s27
      %p29 = scmp.eq.s32.totalorder %s28, 0
      %s31 = sadd.s32 %s30, 1
      %s32 = scalar_select %p29, %s30, %s31
      %p35 = pneg %p29
      %p36 = scmp.eq.s32.totalorder %s20, 2
      %p37 = por %p35, %p36
      %p38 = scmp.ne.s32.totalorder %s30, %s33
      %p39 = scmp.eq.s32.totalorder %s20, 0
      %p40 = por %p38, %p39
      %p41 = scmp.ne.s32.totalorder %s30, %s33
      %p42 = scmp.eq.s32.totalorder %s25, 2
      %p43 = por %p41, %p42
      %p44 = scmp.ne.s32.totalorder %s33, %s34
      %p45 = scmp.eq.s32.totalorder %s25, 0
      %p46 = por %p44, %p45
      %p47 = scmp.ne.s32.totalorder %s33, %s34
      %p48 = scmp.eq.s32.totalorder %s26, 2
      %p49 = por %p47, %p48
      %p51 = scmp.ne.s32.totalorder %s34, %s50
      %p52 = scmp.eq.s32.totalorder %s26, 0
      %p53 = por %p51, %p52
      %s54 = ssub.s32 %s20, %s27
      %p55 = scmp.eq.s32.totalorder %s54, 0
      %s57 = sadd.s32 %s56, 1
      %s58 = scalar_select %p55, %s56, %s57
      %p61 = pneg %p55
      %p62 = scmp.eq.s32.totalorder %s20, 2
      %p63 = por %p61, %p62
      %p64 = scmp.ne.s32.totalorder %s56, %s59
      %p65 = scmp.eq.s32.totalorder %s20, 0
      %p66 = por %p64, %p65
      %p67 = scmp.ne.s32.totalorder %s56, %s59
      %p68 = scmp.eq.s32.totalorder %s25, 2
      %p69 = por %p67, %p68
      %p70 = scmp.ne.s32.totalorder %s59, %s60
      %p71 = scmp.eq.s32.totalorder %s25, 0
      %p72 = por %p70, %p71
      %p73 = scmp.ne.s32.totalorder %s59, %s60
      %p74 = scmp.eq.s32.totalorder %s26, 2
      %p75 = por %p73, %p74
      %p77 = scmp.ne.s32.totalorder %s60, %s76
      %p78 = scmp.eq.s32.totalorder %s26, 0
      %p79 = por %p77, %p78
      %s81 = sadd.s32 %s80, 1
      %p84 = scmp.eq.s32.totalorder %s20, 2
      %p85 = scmp.ne.s32.totalorder %s80, %s82
      %p86 = scmp.eq.s32.totalorder %s20, 0
      %p87 = por %p85, %p86
      %p88 = scmp.ne.s32.totalorder %s80, %s82
      %p89 = scmp.eq.s32.totalorder %s25, 2
      %p90 = por %p88, %p89
      %p91 = scmp.ne.s32.totalorder %s82, %s83
      %p92 = scmp.eq.s32.totalorder %s25, 0
      %p93 = por %p91, %p92
      %p94 = scmp.ne.s32.totalorder %s82, %s83
      %p95 = scmp.eq.s32.totalorder %s26, 2
      %p96 = por %p94, %p95
      %p98 = scmp.ne.s32.totalorder %s83, %s97
      %p99 = scmp.eq.s32.totalorder %s26, 0
      %p100 = por %p98, %p99
      %s102 = sadd.s32 %s101, 1
      %p105 = scmp.eq.s32.totalorder %s20, 2
      %p106 = scmp.ne.s32.totalorder %s101, %s103
      %p107 = scmp.eq.s32.totalorder %s20, 0
      %p108 = por %p106, %p107
      %p109 = scmp.ne.s32.totalorder %s101, %s103
      %p110 = scmp.eq.s32.totalorder %s25, 2
      %p111 = por %p109, %p110
      %p112 = scmp.ne.s32.totalorder %s103, %s104
      %p113 = scmp.eq.s32.totalorder %s25, 0
      %p114 = por %p112, %p113
      %p115 = scmp.ne.s32.totalorder %s103, %s104
      %p116 = scmp.eq.s32.totalorder %s26, 2
      %p117 = por %p115, %p116
      %p119 = scmp.ne.s32.totalorder %s104, %s118
      %p120 = scmp.eq.s32.totalorder %s26, 0
      %p121 = por %p119, %p120
      %s123 = sadd.s32 %s122, 1
      %p126 = scmp.eq.s32.totalorder %s20, 2
      %p127 = scmp.ne.s32.totalorder %s122, %s124
      %p128 = scmp.eq.s32.totalorder %s20, 0
      %p129 = por %p127, %p128
      %p130 = scmp.ne.s32.totalorder %s122, %s124
      %p131 = scmp.eq.s32.totalorder %s25, 2
      %p132 = por %p130, %p131
      %p133 = scmp.ne.s32.totalorder %s124, %s125
      %p134 = scmp.eq.s32.totalorder %s25, 0
      %p135 = por %p133, %p134
      %p136 = scmp.ne.s32.totalorder %s124, %s125
      %p137 = scmp.eq.s32.totalorder %s26, 2
      %p138 = por %p136, %p137
      %p140 = scmp.ne.s32.totalorder %s125, %s139
      %p141 = scmp.eq.s32.totalorder %s26, 0
      %p142 = por %p140, %p141
      %s144 = sadd.s32 %s143, 1
      %p147 = scmp.eq.s32.totalorder %s20, 2
      %p148 = scmp.ne.s32.totalorder %s143, %s145
      %p149 = scmp.eq.s32.totalorder %s20, 0
      %p150 = por %p148, %p149
      %p151 = scmp.ne.s32.totalorder %s143, %s145
      %p152 = scmp.eq.s32.totalorder %s25, 2
      %p153 = por %p151, %p152
      %p154 = scmp.ne.s32.totalorder %s145, %s146
      %p155 = scmp.eq.s32.totalorder %s25, 0
      %p156 = por %p154, %p155
      %p157 = scmp.ne.s32.totalorder %s145, %s146
      %p158 = scmp.eq.s32.totalorder %s26, 2
      %p159 = por %p157, %p158
      %p161 = scmp.ne.s32.totalorder %s146, %s160
      %p162 = scmp.eq.s32.totalorder %s26, 0
      %p163 = por %p161, %p162
      %s165 = sadd.s32 %s164, 1
      %p168 = scmp.eq.s32.totalorder %s20, 2
      %p169 = scmp.ne.s32.totalorder %s164, %s166
      %p170 = scmp.eq.s32.totalorder %s20, 0
      %p171 = por %p169, %p170
      %p172 = scmp.ne.s32.totalorder %s164, %s166
      %p173 = scmp.eq.s32.totalorder %s25, 2
      %p174 = por %p172, %p173
      %p175 = scmp.ne.s32.totalorder %s166, %s167
      %p176 = scmp.eq.s32.totalorder %s25, 0
      %p177 = por %p175, %p176
      %p178 = scmp.ne.s32.totalorder %s166, %s167
      %p179 = scmp.eq.s32.totalorder %s26, 2
      %p180 = por %p178, %p179
      %p182 = scmp.ne.s32.totalorder %s167, %s181
      %p183 = scmp.eq.s32.totalorder %s26, 0
      %p184 = por %p182, %p183
      %s186 = sadd.s32 %s185, 1
      %p189 = scmp.eq.s32.totalorder %s20, 2
      %p190 = scmp.ne.s32.totalorder %s185, %s187
      %p191 = scmp.eq.s32.totalorder %s20, 0
      %p192 = por %p190, %p191
      %p193 = scmp.ne.s32.totalorder %s185, %s187
      %p194 = scmp.eq.s32.totalorder %s25, 2
      %p195 = por %p193, %p194
      %p196 = scmp.ne.s32.totalorder %s187, %s188
      %p197 = scmp.eq.s32.totalorder %s25, 0
      %p198 = por %p196, %p197
      %p199 = scmp.ne.s32.totalorder %s187, %s188
      %p200 = scmp.eq.s32.totalorder %s26, 2
      %p201 = por %p199, %p200
      %p203 = scmp.ne.s32.totalorder %s188, %s202
      %p204 = scmp.eq.s32.totalorder %s26, 0
      %p205 = por %p203, %p204
      %s207 = sadd.s32 %s206, 1
      %p210 = scmp.eq.s32.totalorder %s20, 2
      %p211 = scmp.ne.s32.totalorder %s206, %s208
      %p212 = scmp.eq.s32.totalorder %s20, 0
      %p213 = por %p211, %p212
      %p214 = scmp.ne.s32.totalorder %s206, %s208
      %p215 = scmp.eq.s32.totalorder %s25, 2
      %p216 = por %p214, %p215
      %p217 = scmp.ne.s32.totalorder %s208, %s209
      %p218 = scmp.eq.s32.totalorder %s25, 0
      %p219 = por %p217, %p218
      %p220 = scmp.ne.s32.totalorder %s208, %s209
      %p221 = scmp.eq.s32.totalorder %s26, 2
      %p222 = por %p220, %p221
      %p224 = scmp.ne.s32.totalorder %s209, %s223
      %p225 = scmp.eq.s32.totalorder %s26, 0
      %p226 = por %p224, %p225
      %s227 = ssub.s32 %s20, %s27
      %p228 = scmp.eq.s32.totalorder %s227, 0
      %s230 = sadd.s32 %s229, 1
      %s231 = scalar_select %p228, %s229, %s230
      %p234 = pneg %p228
      %p235 = scmp.eq.s32.totalorder %s20, 2
      %p236 = por %p234, %p235
      %p237 = scmp.ne.s32.totalorder %s229, %s232
      %p238 = scmp.eq.s32.totalorder %s20, 0
      %p239 = por %p237, %p238
      %p240 = scmp.ne.s32.totalorder %s229, %s232
      %p241 = scmp.eq.s32.totalorder %s25, 2
      %p242 = por %p240, %p241
      %p243 = scmp.ne.s32.totalorder %s232, %s233
      %p244 = scmp.eq.s32.totalorder %s25, 0
      %p245 = por %p243, %p244
      %p246 = scmp.ne.s32.totalorder %s232, %s233
      %p247 = scmp.eq.s32.totalorder %s26, 2
      %p248 = por %p246, %p247
      %p250 = scmp.ne.s32.totalorder %s233, %s249
      %p251 = scmp.eq.s32.totalorder %s26, 0
      %p252 = por %p250, %p251
      %p253 = scmp.le.s32.totalorder 1, %s20
      %p254 = scmp.lt.s32.totalorder %s20, 4
      %p255 = pnand %p253, %p254
      %p256 = pneg %p255
      // Predicated region
      $region9: #{tpu_custom_call.1} parent=5 // pred_check
        _
      $region10: #{tpu_custom_call.1} parent=5 // pred_check_branch
        %258 = sbr.rel (%p255) target = $region12
      $region11: #{tpu_custom_call.1} parent=5 // pred_region
        %s259 = ssub.s32 %s20, 1
        // Predicated region
        $region13: #{tpu_custom_call.1} parent=11 // pred_check
          %p260 = pneg %p93
        $region14: #{tpu_custom_call.1} parent=11 // pred_check_branch
          %262 = sbr.rel (%p260) target = $region16
        $region15: #{tpu_custom_call.1} parent=11 // pred_region
          _
        $region16: #{tpu_custom_call.1} parent=11 // pred_fallthru
          _
        // Predicated region
        $region17: #{tpu_custom_call.1} parent=11 // pred_check
          %p263 = pneg %p114
        $region18: #{tpu_custom_call.1} parent=11 // pred_check_branch
          %265 = sbr.rel (%p263) target = $region20
        $region19: #{tpu_custom_call.1} parent=11 // pred_region
          _
        $region20: #{tpu_custom_call.1} parent=11 // pred_fallthru
          _
        // Predicated region
        $region21: #{tpu_custom_call.1} parent=11 // pred_check
          %p266 = pneg %p135
        $region22: #{tpu_custom_call.1} parent=11 // pred_check_branch
          %268 = sbr.rel (%p266) target = $region24
        $region23: #{tpu_custom_call.1} parent=11 // pred_region
          _
        $region24: #{tpu_custom_call.1} parent=11 // pred_fallthru
          _
        // Predicated region
        $region25: #{tpu_custom_call.1} parent=11 // pred_check
          %p269 = pneg %p156
        $region26: #{tpu_custom_call.1} parent=11 // pred_check_branch
          %271 = sbr.rel (%p269) target = $region28
        $region27: #{tpu_custom_call.1} parent=11 // pred_region
          _
        $region28: #{tpu_custom_call.1} parent=11 // pred_fallthru
          _
        // Predicated region
        $region29: #{tpu_custom_call.1} parent=11 // pred_check
          %p272 = pneg %p177
        $region30: #{tpu_custom_call.1} parent=11 // pred_check_branch
          %274 = sbr.rel (%p272) target = $region32
        $region31: #{tpu_custom_call.1} parent=11 // pred_region
          _
        $region32: #{tpu_custom_call.1} parent=11 // pred_fallthru
          _
        // Predicated region
        $region33: #{tpu_custom_call.1} parent=11 // pred_check
          %p275 = pneg %p198
        $region34: #{tpu_custom_call.1} parent=11 // pred_check_branch
          %277 = sbr.rel (%p275) target = $region36
        $region35: #{tpu_custom_call.1} parent=11 // pred_region
          _
        $region36: #{tpu_custom_call.1} parent=11 // pred_fallthru
          _
        // Predicated region
        $region37: #{tpu_custom_call.1} parent=11 // pred_check
          %p278 = pneg %p219
        $region38: #{tpu_custom_call.1} parent=11 // pred_check_branch
          %280 = sbr.rel (%p278) target = $region40
        $region39: #{tpu_custom_call.1} parent=11 // pred_region
          _
        $region40: #{tpu_custom_call.1} parent=11 // pred_fallthru
          _
      $region12: #{tpu_custom_call.1} parent=5 // pred_fallthru
        _
      %p281 = scmp.lt.s32.totalorder %s20, 3
      // Predicated region
      $region41: #{tpu_custom_call.1} parent=5 // pred_check
        %p282 = pneg %p281
      $region42: #{tpu_custom_call.1} parent=5 // pred_check_branch
        %284 = sbr.rel (%p282) target = $region44
      $region43: #{tpu_custom_call.1} parent=5 // pred_region
        // Predicated region
        $region45: #{tpu_custom_call.1} parent=43 // pred_check
          %p285 = pneg %p40
        $region46: #{tpu_custom_call.1} parent=43 // pred_check_branch
          %287 = sbr.rel (%p285) target = $region48
        $region47: #{tpu_custom_call.1} parent=43 // pred_region
          %s288 = smul.u32 2, %s20
          %p289 = scmp.lt.s32.totalorder %s288, 5
          %s290 = scalar_select %p289, %s288, 5
          %s291 = smul.addr %s290, 8
          %s292 = scalar_lea.vmem %s0, %s291
          %s293 = smul.u32 2, %s20
        $region48: #{tpu_custom_call.1} parent=43 // pred_fallthru
          _
        // Predicated region
        $region49: #{tpu_custom_call.1} parent=43 // pred_check
          %p294 = pneg %p66
        $region50: #{tpu_custom_call.1} parent=43 // pred_check_branch
          %296 = sbr.rel (%p294) target = $region52
        $region51: #{tpu_custom_call.1} parent=43 // pred_region
          %s297 = smul.u32 2, %s20
          %p298 = scmp.lt.s32.totalorder %s297, 5
          %s299 = scalar_select %p298, %s297, 5
          %s300 = smul.addr %s299, 8
          %s301 = scalar_lea.vmem %s1, %s300
          %s302 = smul.u32 2, %s20
        $region52: #{tpu_custom_call.1} parent=43 // pred_fallthru
          _
      $region44: #{tpu_custom_call.1} parent=5 // pred_fallthru
        _
      %p303 = scmp.le.s32.totalorder 1, %s20
      %p304 = scmp.lt.s32.totalorder %s20, 4
      %p305 = pnand %p303, %p304
      %p306 = pneg %p305
      // Predicated region
      $region53: #{tpu_custom_call.1} parent=5 // pred_check
        _
      $region54: #{tpu_custom_call.1} parent=5 // pred_check_branch
        %308 = sbr.rel (%p305) target = $region56
      $region55: #{tpu_custom_call.1} parent=5 // pred_region
        %s309 = ssub.s32 %s20, 1
        %s310 = smul.u32 2, %s25
        %p311 = scmp.lt.s32.totalorder %s310, 5
        %s312 = scalar_select %p311, %s310, 5
        %s313 = smul.addr %s312, 8
        %s314 = scalar_lea.vmem %s0, %s313
        %p315 = pneg %p46
        %p316 = pneg %p43
        %s317 = smul.u32 2, %s25
        %p318 = scmp.lt.s32.totalorder %s317, 5
        %s319 = scalar_select %p318, %s317, 5
        %s320 = smul.addr %s319, 8
        %s321 = scalar_lea.vmem %s1, %s320
        %p322 = pneg %p72
        %p323 = pneg %p69
        %p324 = pneg %p93
        %p325 = pneg %p90
        %p326 = pneg %p114
        %p327 = pneg %p111
        %p328 = pneg %p135
        %p329 = pneg %p132
        %p330 = pneg %p156
        %p331 = pneg %p153
        %p332 = pneg %p177
        %p333 = pneg %p174
        %p334 = pneg %p198
        %p335 = pneg %p195
        %p336 = pneg %p219
        %p337 = pneg %p216
        %p338 = pneg %p245
        %p339 = pneg %p242
        %s340 = sand.u32 %s232, 1
        %s341 = scalar_lea.sflag [#allocation4], %s340
        %s342 = sand.u32 %s232, 1
        %s343 = smul.addr %s342, 16
        %s344 = scalar_lea.vmem [#allocation3], %s343
        %s345 = smul.u32 2, %s25
        %p346 = scmp.lt.s32.totalorder %s345, 5
        %s347 = scalar_select %p346, %s345, 5
        %s348 = smul.addr %s347, 8
        %s349 = scalar_lea.vmem %s0, %s348
        %s350 = smul.u32 2, %s25
        %s351 = smul.u32 2, %s25
        %p352 = scmp.lt.s32.totalorder %s351, 5
        %s353 = scalar_select %p352, %s351, 5
        %s354 = smul.addr %s353, 8
        %s355 = scalar_lea.vmem %s1, %s354
        %s356 = smul.u32 2, %s25
        %s357 = smul.u32 2, %s25
        %v358 = vld [vmem:[%s2] sm:$0x3]
        %v359 = vld [vmem:[%s3] sm:$0xff]
        %v360 = vld [vmem:[%s3 + $0x8] sm:$0x3]
        %v361 = vld [vmem:[%s4] sm:$0x1]
        %v362 = vld [vmem:[%s349] sm:$0xff]
        %v363 = vld [vmem:[%s349 + $0x8] sm:$0xff]
        %v364 = vld [vmem:[%s355] sm:$0xff]
        %v365 = vld [vmem:[%s355 + $0x8] sm:$0xff]
        %vm366 = vcmask 80896
        %v368 = vsel %vm366, %v364, 0
        %v371 = vsel %vm366, %v365, 0
        %vm373 = vcmask 1041408
        %v375 = vsel %vm373, %v360, 0
        %377 = vmatpush.msra.mxu0 0.0
        %378 = vmatpush.msra.mxu0 0.0
        %379 = vmatpush.msra.mxu0 0.0
        %380 = vmatpush.msra.mxu0 0.0
        %381 = vmatpush.msra.mxu0 0.0
        %382 = vmatpush.msra.mxu0 0.0
        %383 = vmatpush.msra.mxu0 0.0
        %384 = vmatpush.msra.mxu0 0.0
        %385 = vmatpush.msra.mxu0 0.0
        %386 = vmatpush.msra.mxu0 0.0
        %387 = vmatpush.msra.mxu0 0.0
        %388 = vmatpush.msra.mxu0 0.0
        %389 = vmatpush.msra.mxu0 0.0
        %390 = vmatpush.msra.mxu0 0.0
        %391 = vmatpush.msra.mxu0 %v375
        %392 = vmatpush.msra.mxu0 %v359
        %393 = vmatmul.f32.gmra.mxu0 %v368
        %v394 = vpop.f32.mrf.mxu0
        %v395 = vadd.f32 0.0, %v394
        %396 = vmatmul.f32.gmra.mxu0 %v371
        %v397 = vpop.f32.mrf.mxu0
        %v398 = vadd.f32 0.0, %v397
        %399 = vdwg.mxu0
        %vm400 = vcmask 15360
        %v402 = vsel %vm400, %v362, 0
        %v405 = vsel %vm400, %v363, 0
        %v408 = vsel %vm373, %v358, 0
        %410 = vmatpush.msra.mxu0 0.0
        %411 = vmatpush.msra.mxu0 0.0
        %412 = vmatpush.msra.mxu0 0.0
        %413 = vmatpush.msra.mxu0 0.0
        %414 = vmatpush.msra.mxu0 0.0
        %415 = vmatpush.msra.mxu0 0.0
        %416 = vmatpush.msra.mxu0 0.0
        %417 = vmatpush.msra.mxu0 0.0
        %418 = vmatpush.msra.mxu0 0.0
        %419 = vmatpush.msra.mxu0 0.0
        %420 = vmatpush.msra.mxu0 0.0
        %421 = vmatpush.msra.mxu0 0.0
        %422 = vmatpush.msra.mxu0 0.0
        %423 = vmatpush.msra.mxu0 0.0
        %424 = vmatpush.msra.mxu0 0.0
        %425 = vmatpush.msra.mxu0 %v408
        %426 = vmatmul.f32.gmra.mxu0 %v402
        %v427 = vpop.f32.mrf.mxu0
        %v428 = vadd.f32 %v395, %v427
        %429 = vmatmul.f32.gmra.mxu0 %v405
        %v430 = vpop.f32.mrf.mxu0
        %v431 = vadd.f32 %v398, %v430
        %432 = vdwg.mxu0
        %v434 = vperm.slane %v361, 0
        %v436 = vadd.f32 %v428, %v434
        %v437 = vadd.f32 %v431, %v434
        %v438 = vld [vmem:[%s5] sm:$0xff]
        %v439 = vld [vmem:[%s5 + $0x8] sm:$0xff]
        %v440 = vld [vmem:[%s5 + $0x10] sm:$0xff]
        %v441 = vld [vmem:[%s5 + $0x18] sm:$0xff]
        %v442 = vld [vmem:[%s6] sm:$0x1]
        %v443 = vtanh.pop %v436
        %v444 = vtanh.pop %v437
        %v446 = vperm.slane %v442, 0
        %vm448 = vcmask 261120
        %v450 = vsel %vm448, %v443, 0
        %v453 = vsel %vm448, %v444, 0
        %455 = vmatpush.msra.mxu0 0.0
        %456 = vmatpush.msra.mxu0 0.0
        %457 = vmatpush.msra.mxu0 0.0
        %458 = vmatpush.msra.mxu0 0.0
        %459 = vmatpush.msra.mxu0 0.0
        %460 = vmatpush.msra.mxu0 0.0
        %461 = vmatpush.msra.mxu0 0.0
        %462 = vmatpush.msra.mxu0 0.0
        %463 = vmatpush.msra.mxu0 0.0
        %464 = vmatpush.msra.mxu0 0.0
        %465 = vmatpush.msra.mxu0 0.0
        %466 = vmatpush.msra.mxu0 0.0
        %467 = vmatpush.msra.mxu0 %v441
        %468 = vmatpush.msra.mxu0 %v440
        %469 = vmatpush.msra.mxu0 %v439
        %470 = vmatpush.msra.mxu0 %v438
        %471 = vmatmul.f32.gmra.mxu0 %v450
        %v472 = vpop.f32.mrf.mxu0
        %v473 = vadd.f32 %v446, %v472
        %474 = vmatmul.f32.gmra.mxu0 %v453
        %v475 = vpop.f32.mrf.mxu0
        %v476 = vadd.f32 %v446, %v475
        %477 = vdwg.mxu0
        %v478 = vld [vmem:[%s7] sm:$0xff]
        %v479 = vld [vmem:[%s7 + $0x8] sm:$0xff]
        %v480 = vld [vmem:[%s7 + $0x10] sm:$0xff]
        %v481 = vld [vmem:[%s7 + $0x18] sm:$0xff]
        %v482 = vld [vmem:[#allocation2] sm:$0x1]
        %v483 = vtanh.pop %v473
        %v484 = vtanh.pop %v476
        %v486 = vperm.slane %v482, 0
        %v489 = vsel %vm448, %v483, 0
        %v492 = vsel %vm448, %v484, 0
        %494 = vmatpush.msra.mxu0 0.0
        %495 = vmatpush.msra.mxu0 0.0
        %496 = vmatpush.msra.mxu0 0.0
        %497 = vmatpush.msra.mxu0 0.0
        %498 = vmatpush.msra.mxu0 0.0
        %499 = vmatpush.msra.mxu0 0.0
        %500 = vmatpush.msra.mxu0 0.0
        %501 = vmatpush.msra.mxu0 0.0
        %502 = vmatpush.msra.mxu0 0.0
        %503 = vmatpush.msra.mxu0 0.0
        %504 = vmatpush.msra.mxu0 0.0
        %505 = vmatpush.msra.mxu0 0.0
        %506 = vmatpush.msra.mxu0 %v481
        %507 = vmatpush.msra.mxu0 %v480
        %508 = vmatpush.msra.mxu0 %v479
        %509 = vmatpush.msra.mxu0 %v478
        %510 = vmatmul.f32.gmra.mxu0 %v489
        %v511 = vpop.f32.mrf.mxu0
        %v512 = vadd.f32 %v486, %v511
        %513 = vmatmul.f32.gmra.mxu0 %v492
        %v514 = vpop.f32.mrf.mxu0
        %v515 = vadd.f32 %v486, %v514
        %516 = vdwg.mxu0
        %v517 = vand.u32 2147483647, %v512
        %v518 = vand.u32 2147483647, %v515
        %v519 = vsub.f32 0.0, %v517
        %v520 = vsub.f32 0.0, %v518
        %v521 = vmul.f32 %v519, 1.442695
        %v522 = vpow.pop %v521
        %v523 = vmul.f32 %v520, 1.442695
        %v524 = vpow.pop %v523
        %v525 = vadd.f32 %v522, 1.0
        %v526 = vadd.f32 %v524, 1.0
        %v527 = vrcp.pop %v525
        %v528 = vmul.f32 %v525, %v527
        %v529 = vsub.f32 1.0, %v528
        %v530 = vmul.f32 %v527, %v529
        %v531 = vadd.f32 %v527, %v530
        %vm532 = vweird.f32 %v525
        %vm533 = vweird.f32 %v527
        %vm534 = vmor %vm532, %vm533
        %v535 = vsel %vm534, %v527, %v531
        %v536 = vand.u32 2147483647, %v525
        %vm537 = vcmp.eq.f32.partialorder %v536, 8.507059e+37
        %v538 = vand.u32 %v525, 2147483648
        %v539 = vor.u32 1.1754944e-38, %v538
        %v540 = vsel %vm537, %v539, %v535
        %v541 = vmul.f32 %v522, %v540
        %v542 = vrcp.pop %v526
        %v543 = vmul.f32 %v526, %v542
        %v544 = vsub.f32 1.0, %v543
        %v545 = vmul.f32 %v542, %v544
        %v546 = vadd.f32 %v542, %v545
        %vm547 = vweird.f32 %v526
        %vm548 = vweird.f32 %v542
        %vm549 = vmor %vm547, %vm548
        %v550 = vsel %vm549, %v542, %v546
        %v551 = vand.u32 2147483647, %v526
        %vm552 = vcmp.eq.f32.partialorder %v551, 8.507059e+37
        %v553 = vand.u32 %v526, 2147483648
        %v554 = vor.u32 1.1754944e-38, %v553
        %v555 = vsel %vm552, %v554, %v550
        %v556 = vmul.f32 %v524, %v555
        %vm557 = vcmp.ge.f32.partialorder %v512, 0.0
        %vm558 = vcmp.ge.f32.partialorder %v515, 0.0
        %v559 = vsub.f32 1.0, %v541
        %v560 = vsub.f32 1.0, %v556
        %v561 = vsel %vm557, %v541, %v559
        %v562 = vsel %vm558, %v556, %v560
        %563 = vxpose.xlu0.b32.start [1/16] %v478, 128
        %564 = vxpose.xlu0.b32.cont [2/16] %v479, 128
        %565 = vxpose.xlu0.b32.cont [3/16] %v480, 128
        %566 = vxpose.xlu0.b32.cont [4/16] %v481, 128
        %567 = vxpose.xlu0.b32.cont [5/16] 0.0, 128
        %568 = vxpose.xlu0.b32.cont [6/16] 0.0, 128
        %569 = vxpose.xlu0.b32.cont [7/16] 0.0, 128
        %570 = vxpose.xlu0.b32.cont [8/16] 0.0, 128
        %571 = vxpose.xlu0.b32.cont [9/16] 0.0, 128
        %572 = vxpose.xlu0.b32.cont [10/16] 0.0, 128
        %573 = vxpose.xlu0.b32.cont [11/16] 0.0, 128
        %574 = vxpose.xlu0.b32.cont [12/16] 0.0, 128
        %575 = vxpose.xlu0.b32.cont [13/16] 0.0, 128
        %576 = vxpose.xlu0.b32.cont [14/16] 0.0, 128
        %577 = vxpose.xlu0.b32.cont [15/16] 0.0, 128
        %578 = vxpose.xlu0.b32.end [16/16] 0.0, 128
        %v579 = vpop.trf.xlu0
        %v580 = vpop.trf.xlu0
        %v581 = vpop.trf.xlu0
        %v582 = vpop.trf.xlu0
        %v583 = vpop.trf.xlu0
        %v584 = vpop.trf.xlu0
        %v585 = vpop.trf.xlu0
        %v586 = vpop.trf.xlu0
        %v587 = vpop.trf.xlu0
        %v588 = vpop.trf.xlu0
        %v589 = vpop.trf.xlu0
        %v590 = vpop.trf.xlu0
        %v591 = vpop.trf.xlu0
        %v592 = vpop.trf.xlu0
        %v593 = vpop.trf.xlu0
        %v594 = vpop.trf.xlu0
        %v595 = vperm.slane %v579, 0
        %v596 = vmul.f32 %v483, %v483
        %v597 = vmul.f32 %v484, %v484
        %v598 = vsub.f32 1.0, %v596
        %v599 = vsub.f32 1.0, %v597
        %v600 = vmul.f32 %v595, %v598
        %v601 = vmul.f32 %v595, %v599
        %v603 = vsel %vm448, %v600, 0
        %v606 = vsel %vm448, %v601, 0
        %v609 = vsel %vm448, %v438, 0
        %v612 = vsel %vm448, %v439, 0
        %v615 = vsel %vm448, %v440, 0
        %v618 = vsel %vm448, %v441, 0
        %620 = vmatpush.xpose.msra.mxu0 0.0
        %621 = vmatpush.xpose.msra.mxu0 0.0
        %622 = vmatpush.xpose.msra.mxu0 0.0
        %623 = vmatpush.xpose.msra.mxu0 0.0
        %624 = vmatpush.xpose.msra.mxu0 0.0
        %625 = vmatpush.xpose.msra.mxu0 0.0
        %626 = vmatpush.xpose.msra.mxu0 0.0
        %627 = vmatpush.xpose.msra.mxu0 0.0
        %628 = vmatpush.xpose.msra.mxu0 0.0
        %629 = vmatpush.xpose.msra.mxu0 0.0
        %630 = vmatpush.xpose.msra.mxu0 0.0
        %631 = vmatpush.xpose.msra.mxu0 0.0
        %632 = vmatpush.xpose.msra.mxu0 %v618
        %633 = vmatpush.xpose.msra.mxu0 %v615
        %634 = vmatpush.xpose.msra.mxu0 %v612
        %635 = vmatpush.xpose.msra.mxu0 %v609
        %636 = vmatmul.f32.gmra.mxu0 %v603
        %v637 = vpop.f32.mrf.mxu0
        %v638 = vadd.f32 0.0, %v637
        %639 = vmatmul.f32.gmra.mxu0 %v606
        %v640 = vpop.f32.mrf.mxu0
        %v641 = vadd.f32 0.0, %v640
        %642 = vdwg.mxu0
        %v643 = vmul.f32 %v443, %v443
        %v644 = vmul.f32 %v444, %v444
        %v645 = vsub.f32 1.0, %v643
        %v646 = vsub.f32 1.0, %v644
        %v647 = vmul.f32 %v638, %v645
        %v648 = vmul.f32 %v641, %v646
        %v650 = vsel %vm448, %v647, 0
        %v653 = vsel %vm448, %v648, 0
        %v655 = vsel %vm448, %v358, 0
        %657 = vmatpush.xpose.msra.mxu0 0.0
        %658 = vmatpush.xpose.msra.mxu0 0.0
        %659 = vmatpush.xpose.msra.mxu0 0.0
        %660 = vmatpush.xpose.msra.mxu0 0.0
        %661 = vmatpush.xpose.msra.mxu0 0.0
        %662 = vmatpush.xpose.msra.mxu0 0.0
        %663 = vmatpush.xpose.msra.mxu0 0.0
        %664 = vmatpush.xpose.msra.mxu0 0.0
        %665 = vmatpush.xpose.msra.mxu0 0.0
        %666 = vmatpush.xpose.msra.mxu0 0.0
        %667 = vmatpush.xpose.msra.mxu0 0.0
        %668 = vmatpush.xpose.msra.mxu0 0.0
        %669 = vmatpush.xpose.msra.mxu0 0.0
        %670 = vmatpush.xpose.msra.mxu0 0.0
        %671 = vmatpush.xpose.msra.mxu0 0.0
        %672 = vmatpush.xpose.msra.mxu0 %v655
        %673 = vmatmul.f32.gmra.mxu0 %v650
        %v674 = vpop.f32.mrf.mxu0
        %v675 = vadd.f32 0.0, %v674
        %676 = vmatmul.f32.gmra.mxu0 %v653
        %v677 = vpop.f32.mrf.mxu0
        %v678 = vadd.f32 0.0, %v677
        %679 = vdwg.mxu0
        %682 = vrot.lane.b32.xlu0 %v561, 1
        %v683 = vpop.permute.xlu0 %682
        %684 = vrot.lane.b32.xlu0 %v562, 1
        %v685 = vpop.permute.xlu0 %684
        %690 = vrot.lane.b32.xlu0 %v675, 2
        %v691 = vpop.permute.xlu0 %690
        %692 = vrot.lane.b32.xlu0 %v678, 2
        %v693 = vpop.permute.xlu0 %692
        %vm696 = vcmask 7168
        %v697 = vsel %vm696, %v512, %v683
        %v698 = vsel %vm696, %v515, %v685
        %v699 = vsel %vm400, %v697, %v691
        %v700 = vsel %vm400, %v698, %v693
        %vm701 = vcmask 31744
        %v702 = vsel %vm701, %v699, 0.0
        %v703 = vsel %vm701, %v700, 0.0
        %704 = vst [vmem:[%s344] sm:$0xff] %v702
        %705 = vst [vmem:[%s344 + $0x8] sm:$0xff] %v703
        %s706 = sand.u32 %s232, 1
        %s707 = scalar_lea.sflag [#allocation4], %s706
        %s708 = sand.u32 %s232, 1
        %s709 = smul.addr %s708, 16
        %s710 = scalar_lea.vmem [#allocation3], %s709
        // Predicated region
        $region57: #{tpu_custom_call.1} parent=55 // pred_check
          %p711 = pneg %p242
        $region58: #{tpu_custom_call.1} parent=55 // pred_check_branch
          %713 = sbr.rel (%p711) target = $region60
        $region59: #{tpu_custom_call.1} parent=55 // pred_region
          %s714 = smul.u32 2, %s25
          %716 = vsyncadd %s707, 0
          %s717 = smul.addr %s714, 8
          %s718 = scalar_lea.hbm %s9, %s717
          %s719 = sshll.u32 %s710, 4
          %s720 = int_to_ptr.vmem [resolvable:$true] %s719
          %s721 = sshll.u32 %s718, 4
          %s722 = int_to_ptr.hbm [resolvable:$true] %s721
          %727 = dma.vmem_to_hbm [thread:$0]  %s720, 256, %s722, %s707, 128, 128, 8
        $region60: #{tpu_custom_call.1} parent=55 // pred_fallthru
          _
      $region56: #{tpu_custom_call.1} parent=5 // pred_fallthru
        _
      %p728 = scmp.le.s32.totalorder 2, %s20
      // Predicated region
      $region61: #{tpu_custom_call.1} parent=5 // pred_check
        %p729 = pneg %p728
      $region62: #{tpu_custom_call.1} parent=5 // pred_check_branch
        %731 = sbr.rel (%p729) target = $region64
      $region63: #{tpu_custom_call.1} parent=5 // pred_region
        %s732 = ssub.s32 %s20, 2
        // Predicated region
        $region65: #{tpu_custom_call.1} parent=63 // pred_check
          %p733 = pneg %p248
        $region66: #{tpu_custom_call.1} parent=63 // pred_check_branch
          %735 = sbr.rel (%p733) target = $region68
        $region67: #{tpu_custom_call.1} parent=63 // pred_region
          %s736 = sand.u32 %s233, 1
          %s737 = scalar_lea.sflag [#allocation4], %s736
          %s738 = sand.u32 %s233, 1
          %s739 = smul.addr %s738, 16
          %s740 = scalar_lea.vmem [#allocation3], %s739
          %742 = dma.done %s737, 256
        $region68: #{tpu_custom_call.1} parent=63 // pred_fallthru
          _
      $region64: #{tpu_custom_call.1} parent=5 // pred_fallthru
        _
    $region6: #{tpu_custom_call.1} parent=1 // loop_footer
      %s24 = sadd.s32 1, %s20
    $region7: #{tpu_custom_call.1} parent=1 // loop_footer_branch
      %19 = sbr.rel target = $region3
    $region8: #{tpu_custom_call.1} parent=1 // loop_exit
      _
    %743 = vsyncpa [#allocation4], 1
    %s744 = scalar_lea.sflag [#allocation4], 1
    %745 = vsyncpa %s744, 1

</llo_original>
